<compile_context>
chip_gen: v7x
topology: tpu7x:2x2x1
jax: 0.10.0
libtpu: 0.0.40
codegen_flags: <defaults>
</compile_context>

<pallas_src>
import math
import functools

import jax
import jax.numpy as jnp
from jax import lax
from jax.experimental import pallas as pl
from jax.experimental.pallas import tpu as pltpu


# Explicit scoped-VMEM ceiling: fits v7x's 64 MiB physical and raises the
# v5e 16 MiB / v6e 32 MiB scoped defaults for production-shape tiles.
VMEM_LIMIT_BYTES = 48 * 1024 * 1024


# ----------------------------------------------------------------------------
# Plain-JAX glue
# ----------------------------------------------------------------------------
def positional_encoding(max_len, d_model):
    """PositionalEncoding.pe, shape [max_len, d_model] (float32)."""
    position = jnp.arange(max_len, dtype=jnp.float32)[:, None]
    div_term = jnp.exp(jnp.arange(0, d_model, 2, dtype=jnp.float32)
                       * (-(math.log(10000.0) / float(d_model))))
    pe = jnp.zeros((max_len, d_model), jnp.float32)
    pe = pe.at[:, 0::2].set(jnp.sin(position * div_term))
    pe = pe.at[:, 1::2].set(jnp.cos(position * div_term))
    return pe


def avg_pool_nchw(x, k):
    """nn.AvgPool2d(k, stride=1) analog (glue, not the hot path)."""
    s = lax.reduce_window(x, 0.0, lax.add, (1, 1, k, k), (1, 1, 1, 1), "VALID")
    return s / float(k * k)


def fuse_qk_unary_weights(wq, wk, bk, wu, bu, reduce_dim):
    """Pad the q/k projections to a 128-lane width and fuse the unary layer as
    column `reduce_dim` of the k projection.

    The padded q columns are exactly zero, so q @ k_full^T == q[:,:rd] @ k^T
    exactly; the unary logits ride along in column `reduce_dim` of k_full.
    The q bias is dropped entirely: per-sample token mean-centering cancels any
    per-channel constant (bit-exact).  Weights returned bf16, bias f32.
    """
    C = wq.shape[0]
    DK = ((reduce_dim + 1 + 127) // 128) * 128
    wq_f = jnp.zeros((C, DK), jnp.float32).at[:, :reduce_dim].set(wq)
    wk_f = jnp.zeros((C, DK), jnp.float32).at[:, :reduce_dim].set(wk)
    wk_f = wk_f.at[:, reduce_dim].set(wu[:, 0])
    bk_f = jnp.zeros((1, DK), jnp.float32).at[:, :reduce_dim].set(bk)
    bk_f = bk_f.at[:, reduce_dim].set(bu[:, 0])
    return wq_f.astype(jnp.bfloat16), wk_f.astype(jnp.bfloat16), bk_f


def pad_output_lanes(w, b, lanes=128):
    """Zero-pad an (fan_in, n_out) linear layer to `lanes` output columns so
    the kernel's output store is lane-dense; real columns are [:, :n_out]."""
    fan_in, n_out = w.shape
    w_p = jnp.zeros((fan_in, lanes), jnp.float32).at[:, :n_out].set(w)
    b_p = jnp.zeros((1, lanes), jnp.float32).at[:, :n_out].set(b)
    return w_p.astype(jnp.bfloat16), b_p


# ----------------------------------------------------------------------------
# CISA attention kernel (shared by the RPN path and the RCNN head)
# grid = (batch-group, Lq-block, shot);  shot is the reduction axis.
# ----------------------------------------------------------------------------
def _cisa_kernel(q_ref, qmean_ref, sup_ref, wq_ref, wk_ref, bk_ref,
                 corr_ref, q_scr, acc_scr, *, n_shot, reduce_dim, unary_gamma):
    G, Lq, C = q_ref.shape                 # G query samples share one support set
    DK = wq_ref.shape[1]
    shot = pl.program_id(2)

    # ---- per-(batch, Lq-block) init: project + center q once, zero the acc
    @pl.when(shot == 0)
    def _init():
        x = q_ref[...].reshape(G * Lq, C)                        # f32 query tokens
        q = jnp.dot(x.astype(jnp.bfloat16), wq_ref[...],
                    preferred_element_type=jnp.float32)          # [G*Lq, DK]
        qm = jnp.dot(qmean_ref[...].astype(jnp.bfloat16), wq_ref[...],
                     preferred_element_type=jnp.float32)         # [G, DK]
        # q -= q.mean(tokens): projection of the host-precomputed token mean
        # (exact; also why the q bias could be dropped on the host).
        q3 = q.reshape(G, Lq, DK) - qm.reshape(G, 1, DK)
        q_scr[...] = q3.reshape(G * Lq, DK).astype(jnp.bfloat16)
        acc_scr[...] = jnp.zeros_like(acc_scr)

    # ---- per-shot body: k projection, dual-awareness attention, accumulate
    s_i = sup_ref[...]                                           # [S, C] bf16 (PE fused)
    ku = jnp.dot(s_i, wk_ref[...],
                 preferred_element_type=jnp.float32) + bk_ref[...]      # [S, DK]
    # NOTE: reference's `k -= k.mean(1)` is dropped: it shifts every logit row
    # by a per-row constant, which softmax over support tokens is invariant to.
    ku_bf = ku.astype(jnp.bfloat16)

    inv_sqrt = 1.0 / math.sqrt(reduce_dim)
    logits = lax.dot_general(q_scr[...], ku_bf, (((1,), (1,)), ((), ())),
                             preferred_element_type=jnp.float32) * inv_sqrt
    m = jnp.max(logits, axis=-1, keepdims=True)
    e = jnp.exp(logits - m)
    attn = e * pl.reciprocal(jnp.sum(e, axis=-1, keepdims=True), approx=True)

    # unary logits live in column `reduce_dim` of ku; pull them out as a row
    # with a one-hot matmul (avoids an (S,1)->(1,S) relayout), softmax over S.
    onehot = (lax.broadcasted_iota(jnp.int32, (1, DK), 1) == reduce_dim
              ).astype(jnp.bfloat16)
    u_logit = lax.dot_general(onehot, ku_bf, (((1,), (1,)), ((), ())),
                              preferred_element_type=jnp.float32)        # [1, S]
    ue = jnp.exp(u_logit - jnp.max(u_logit, axis=-1, keepdims=True))
    u = ue * pl.reciprocal(jnp.sum(ue, axis=-1, keepdims=True), approx=True)

    # fused dual-awareness weight, single MXU call per shot
    attn_plus = (attn + unary_gamma * u).astype(jnp.bfloat16)            # [G*Lq, S]
    acc_scr[...] += jnp.dot(attn_plus, s_i, preferred_element_type=jnp.float32)

    # ---- finalize: mean over shots, attention_type == 'product'
    @pl.when(shot == n_shot - 1)
    def _done():
        dense = acc_scr[...] * (1.0 / n_shot)
        corr_ref[...] = q_ref[...] * dense.reshape(G, Lq, C)


def cisa_attention(query_tok, query_mean, support_bf, wq_bf, wk_bf, bk_f,
                   reduce_dim, unary_gamma, group_size, lq_block=None):
    """query_tok: [N, Lq, C] f32; query_mean: [N//G, G, C] f32 (per-sample
    token mean); support_bf: [N//G, n_shot, S, C] bf16 (PE pre-added).

    Consecutive blocks of `group_size` query samples share one support set
    (1 for the RPN path, rois_per_batch for the RCNN head) so the support DMA
    is shared across the group; shots are pipelined as a grid reduction axis.
    """
    N, Lq, C = query_tok.shape
    Nsup, n_shot, S, _ = support_bf.shape
    G = group_size
    assert N == Nsup * G
    Lqb = Lq if lq_block is None else lq_block
    assert Lq % Lqb == 0
    DK = wq_bf.shape[1]
    kernel = functools.partial(_cisa_kernel, n_shot=n_shot,
                               reduce_dim=reduce_dim, unary_gamma=unary_gamma)
    const = dict(pipeline_mode=pl.Buffered(buffer_count=1))   # single-buffer weights
    return pl.pallas_call(
        kernel,
        out_shape=jax.ShapeDtypeStruct((N, Lq, C), jnp.float32),
        grid=(Nsup, Lq // Lqb, n_shot),
        in_specs=[
            pl.BlockSpec((G, Lqb, C), lambda b, l, s: (b, l, 0)),
            pl.BlockSpec((None, G, C), lambda b, l, s: (b, 0, 0)),
            pl.BlockSpec((None, None, S, C), lambda b, l, s: (b, s, 0, 0)),
            pl.BlockSpec((C, DK), lambda b, l, s: (0, 0), **const),
            pl.BlockSpec((C, DK), lambda b, l, s: (0, 0), **const),
            pl.BlockSpec((1, DK), lambda b, l, s: (0, 0), **const),
        ],
        out_specs=pl.BlockSpec((G, Lqb, C), lambda b, l, s: (b, l, 0)),
        scratch_shapes=[pltpu.VMEM((G * Lqb, DK), jnp.bfloat16),   # cached centered q
                        pltpu.VMEM((G * Lqb, C), jnp.float32)],    # shot accumulator
        compiler_params=pltpu.CompilerParams(
            dimension_semantics=("parallel", "parallel", "arbitrary"),
            vmem_limit_bytes=VMEM_LIMIT_BYTES),
    )(query_tok, query_mean, support_bf, wq_bf, wk_bf, bk_f)


# ----------------------------------------------------------------------------
# RCNN-head score kernel: rcnn_transform_layer + FFN (linear -> relu -> linear)
# ----------------------------------------------------------------------------
def _score_kernel(corr_ref, wt_ref, bt_ref, w1_ref, b1_ref, w2_ref, b2_ref,
                  score_ref):
    Rblk, L, C = corr_ref.shape
    D = wt_ref.shape[1]

    # rcnn_transform_layer over every ROI token of the block in ONE matmul
    x = corr_ref[...].reshape(Rblk * L, C).astype(jnp.bfloat16)
    t = jnp.dot(x, wt_ref[...], preferred_element_type=jnp.float32) + bt_ref[...]
    t3 = t.reshape(Rblk, L, D)

    # token-major flatten (== correlation_feat.view(n_roi, -1)) built with
    # explicit lane concatenation (layout-safe; no minor-dim reshape needed).
    t_flat = jnp.concatenate([t3[:, l, :] for l in range(L)], axis=1)   # [Rblk, L*D]

    # FFN.linear1 as ONE big-K matmul, relu, lane-padded linear2 (dense store).
    h = jnp.dot(t_flat.astype(jnp.bfloat16), w1_ref[...],
                preferred_element_type=jnp.float32) + b1_ref[...]
    h = jnp.maximum(h, 0.0).astype(jnp.bfloat16)
    score_ref[...] = jnp.dot(h, w2_ref[...],
                             preferred_element_type=jnp.float32) + b2_ref[...]


def rcnn_score(corr, wt_bf, bt, w1_bf, b1, w2p_bf, b2p, rois_per_block):
    """corr: [R, L, C] f32; w1_bf is the flat (L*D, Hh) FFN weight (token-major
    flatten order); w2p_bf/b2p are lane-padded.  Returns [R, 2] scores."""
    R, L, C = corr.shape
    D = wt_bf.shape[1]
    Hh = w1_bf.shape[1]
    PAD = w2p_bf.shape[1]
    Rblk = rois_per_block
    assert R % Rblk == 0
    const = dict(pipeline_mode=pl.Buffered(buffer_count=1))
    scores = pl.pallas_call(
        _score_kernel,
        out_shape=jax.ShapeDtypeStruct((R, PAD), jnp.float32),
        grid=(R // Rblk,),
        in_specs=[
            pl.BlockSpec((Rblk, L, C), lambda r: (r, 0, 0)),
            pl.BlockSpec((C, D), lambda r: (0, 0), **const),
            pl.BlockSpec((1, D), lambda r: (0, 0), **const),
            pl.BlockSpec((L * D, Hh), lambda r: (0, 0), **const),
            pl.BlockSpec((1, Hh), lambda r: (0, 0), **const),
            pl.BlockSpec((Hh, PAD), lambda r: (0, 0), **const),
            pl.BlockSpec((1, PAD), lambda r: (0, 0), **const),
        ],
        out_specs=pl.BlockSpec((Rblk, PAD), lambda r: (r, 0)),
        compiler_params=pltpu.CompilerParams(
            dimension_semantics=("parallel",),
            vmem_limit_bytes=VMEM_LIMIT_BYTES),
    )(corr, wt_bf, bt, w1_bf, b1, w2p_bf, b2p)
    return scores[:, :2]            # lane-dense store; real scores are 2 columns


# ----------------------------------------------------------------------------
# Main
# ----------------------------------------------------------------------------
if __name__ == "__main__":
    # Small shapes consistent with the module structure.
    B, C, H, W = 2, 128, 8, 8          # base_feat stands in for RCNN_base output
    n_shot = 2
    Hs = Ws = 8                        # support feature spatial (20x20 in orig)
    rpn_reduce_dim = 64
    rcnn_reduce_dim = 64
    rcnn_dim = 32                      # rcnn_transform_layer output (64 in orig)
    ffn_hidden = 128                   # FFN hidden (dim_in=1024 in orig)
    pool_k = 5                         # AvgPool2d(14,stride=1) analog: 8 -> 4
    P = Hs - pool_k + 1                # pooled spatial = 4 (7 in orig)
    rois_per_batch = 4
    n_roi = B * rois_per_batch
    unary_gamma = 0.1
    L = H * W
    S_rpn = Hs * Ws
    S_rcnn = P * P

    key = jax.random.PRNGKey(0)
    ks = jax.random.split(key, 16)

    # TODO(synk): RCNN_base / _RPN / ROIAlign / _ProposalTargetLayer /
    # RCNN_bbox_pred are undefined in the snippet; synthetic tensors stand in.
    base_feat = jax.random.normal(ks[0], (B, C, H, W), jnp.float32)
    pos_support_feat = jax.random.normal(ks[1], (B, n_shot, C, Hs, Ws),
                                         jnp.float32)
    pooled_feat = jax.random.normal(ks[2], (n_roi, C, P, P), jnp.float32)

    def lin_w(k, fan_in, fan_out, std):
        return std * jax.random.normal(k, (fan_in, fan_out), jnp.float32)

    # CISA projections (init.normal_(std=0.01), zero bias).  The adapt_q biases
    # are mathematically dead (cancelled by the token mean-centering) and are
    # therefore not materialised.
    wq_rpn = lin_w(ks[3], C, rpn_reduce_dim, 0.01)
    wk_rpn = lin_w(ks[4], C, rpn_reduce_dim, 0.01)
    bk_rpn = jnp.zeros((1, rpn_reduce_dim), jnp.float32)
    wu_rpn = lin_w(ks[5], C, 1, 0.01)
    bu_rpn = jnp.zeros((1, 1), jnp.float32)

    wq_rc = lin_w(ks[6], C, rcnn_reduce_dim, 0.01)
    wk_rc = lin_w(ks[7], C, rcnn_reduce_dim, 0.01)
    bk_rc = jnp.zeros((1, rcnn_reduce_dim), jnp.float32)
    wu_rc = lin_w(ks[8], C, 1, 0.01)
    bu_rc = jnp.zeros((1, 1), jnp.float32)

    # rcnn_transform_layer + FFN(output_score_layer) parameters.
    wt = lin_w(ks[9], C, rcnn_dim, 0.05)
    bt = jnp.zeros((1, rcnn_dim), jnp.float32)
    w1 = lin_w(ks[10], S_rcnn * rcnn_dim, ffn_hidden, 0.05)   # token-major flatten
    b1 = jnp.zeros((1, ffn_hidden), jnp.float32)
    w2 = lin_w(ks[11], ffn_hidden, 2, 0.05)
    b2 = jnp.zeros((1, 2), jnp.float32)

    # ---------------- RPN path ----------------
    query_mat = jnp.transpose(base_feat.reshape(B, C, L), (0, 2, 1))        # [B,L,C]
    qmean_rpn = jnp.mean(query_mat, axis=1).reshape(B, 1, C)                # [B,1,C]
    support_tok = jnp.transpose(
        pos_support_feat.reshape(B, n_shot, C, S_rpn), (0, 1, 3, 2))        # [B,ns,S,C]
    pe_rpn = positional_encoding(S_rpn, C)                    # rpn_pos_encoding_layer
    support_rpn_bf = (support_tok + pe_rpn[None, None]).astype(jnp.bfloat16)

    wqf_rpn, wkf_rpn, bkf_rpn = fuse_qk_unary_weights(
        wq_rpn, wk_rpn, bk_rpn, wu_rpn, bu_rpn, rpn_reduce_dim)

    corr_tok = cisa_attention(query_mat, qmean_rpn, support_rpn_bf,
                              wqf_rpn, wkf_rpn, bkf_rpn,
                              rpn_reduce_dim, unary_gamma,
                              group_size=1, lq_block=L // 2)   # Lq-split: >=2 steps/core
    # correlation_feat = base_feat * dense_support_feature (NCHW)
    correlation_feat = jnp.transpose(corr_tok, (0, 2, 1)).reshape(B, C, H, W)
    # TODO(synk): RCNN_rpn / proposal target / ROIAlign are not implementable here.

    # ---------------- RCNN head ----------------
    pooled_support = avg_pool_nchw(
        pos_support_feat.reshape(B * n_shot, C, Hs, Ws), pool_k)
    pooled_support = pooled_support.reshape(B, n_shot, C, P, P)

    pe_rcnn = positional_encoding(S_rcnn, C)                  # pos_encoding_layer
    query_r = jnp.transpose(pooled_feat.reshape(n_roi, C, S_rcnn), (0, 2, 1))
    query_r = query_r + pe_rcnn[None]                         # query gets PE in rcnn_head
    qmean_rc = jnp.mean(query_r, axis=1).reshape(B, rois_per_batch, C)
    support_r = jnp.transpose(
        pooled_support.reshape(B, n_shot, C, S_rcnn), (0, 1, 3, 2))         # [B,ns,S,C]
    support_rc_bf = (support_r + pe_rcnn[None, None]).astype(jnp.bfloat16)

    wqf_rc, wkf_rc, bkf_rc = fuse_qk_unary_weights(
        wq_rc, wk_rc, bk_rc, wu_rc, bu_rc, rcnn_reduce_dim)

    corr_r = cisa_attention(query_r, qmean_rc, support_rc_bf,
                            wqf_rc, wkf_rc, bkf_rc,
                            rcnn_reduce_dim, unary_gamma,
                            group_size=rois_per_batch)

    w2p_bf, b2p = pad_output_lanes(w2, b2, 128)
    cls_score = rcnn_score(corr_r, wt.astype(jnp.bfloat16), bt,
                           w1.astype(jnp.bfloat16), b1, w2p_bf, b2p,
                           rois_per_block=min(128, n_roi))                  # [n_roi,2]
    cls_prob = jax.nn.softmax(cls_score, axis=1)
    # TODO(synk): bbox_pred needs RCNN_bbox_pred/_head_to_tail (not defined).

    jax.block_until_ready((correlation_feat, cls_score, cls_prob))
    assert correlation_feat.shape == (B, C, H, W)
    assert cls_prob.shape == (n_roi, 2)
    print("KERNEL_OK")
</pallas_src>

<mosaic_0001>
module attributes {stable_mosaic.version = 11 : i64} {
  func.func @_cisa_kernel(%arg0: i32, %arg1: i32, %arg2: i32, %arg3: memref<1x32x128xf32, #tpu.memory_space<vmem>>, %arg4: memref<1x1x128xf32, #tpu.memory_space<vmem>>, %arg5: memref<1x1x64x128xbf16, #tpu.memory_space<vmem>>, %arg6: memref<128x128xbf16, #tpu.memory_space<vmem>>, %arg7: memref<128x128xbf16, #tpu.memory_space<vmem>>, %arg8: memref<1x128xf32, #tpu.memory_space<vmem>>, %arg9: memref<1x32x128xf32, #tpu.memory_space<vmem>>, %arg10: memref<32x128xbf16, #tpu.memory_space<vmem>>, %arg11: memref<32x128xf32, #tpu.memory_space<vmem>>) attributes {dimension_semantics = [#tpu.dimension_semantics<parallel>, #tpu.dimension_semantics<parallel>, #tpu.dimension_semantics<arbitrary>], iteration_bounds = array<i64: 2, 2, 2>, scalar_prefetch = 0 : i64, scratch_operands = 2 : i64, tpu.core_type = #tpu.core_type<tc>, window_params = [{transform_indices = @transform_0, window_bounds = array<i64: 1, 32, 128>}, {transform_indices = @transform_1, window_bounds = array<i64: 1, 1, 128>}, {transform_indices = @transform_2, window_bounds = array<i64: 1, 1, 64, 128>}, {pipeline_mode = #tpu.pipeline_mode<synchronous>, transform_indices = @transform_3, window_bounds = array<i64: 128, 128>}, {pipeline_mode = #tpu.pipeline_mode<synchronous>, transform_indices = @transform_4, window_bounds = array<i64: 128, 128>}, {pipeline_mode = #tpu.pipeline_mode<synchronous>, transform_indices = @transform_5, window_bounds = array<i64: 1, 128>}, {transform_indices = @transform_6, window_bounds = array<i64: 1, 32, 128>}]} {
    %c0_i32 = arith.constant 0 : i32
    %0 = arith.cmpi eq, %arg2, %c0_i32 : i32
    %1 = arith.extui %0 : i1 to i32
    %c0_i32_0 = arith.constant 0 : i32
    %2 = arith.cmpi ne, %1, %c0_i32_0 : i32
    scf.if %2 {
      %c0_24 = arith.constant 0 : index
      %c0_25 = arith.constant 0 : index
      %c0_26 = arith.constant 0 : index
      %54 = vector.load %arg3[%c0_24, %c0_25, %c0_26] : memref<1x32x128xf32, #tpu.memory_space<vmem>>, vector<1x32x128xf32>
      %55 = vector.shape_cast %54 : vector<1x32x128xf32> to vector<32x128xf32>
      %56 = arith.truncf %55 : vector<32x128xf32> to vector<32x128xbf16>
      %c0_27 = arith.constant 0 : index
      %c0_28 = arith.constant 0 : index
      %57 = vector.load %arg6[%c0_27, %c0_28] : memref<128x128xbf16, #tpu.memory_space<vmem>>, vector<128x128xbf16>
      %cst_29 = arith.constant dense<0.000000e+00> : vector<32x128xf32>
      %58 = tpu.matmul %56, %57, %cst_29 {dimension_numbers = #tpu.dot_dimension_numbers<[1], [0], [0], [1], [0, 0, 1, 1], [], []>} : vector<32x128xbf16>, vector<128x128xbf16>, vector<32x128xf32> -> vector<32x128xf32>
      %c0_30 = arith.constant 0 : index
      %c0_31 = arith.constant 0 : index
      %c0_32 = arith.constant 0 : index
      %59 = vector.load %arg4[%c0_30, %c0_31, %c0_32] : memref<1x1x128xf32, #tpu.memory_space<vmem>>, vector<1x1x128xf32>
      %60 = vector.shape_cast %59 : vector<1x1x128xf32> to vector<1x128xf32>
      %61 = arith.truncf %60 : vector<1x128xf32> to vector<1x128xbf16>
      %c0_33 = arith.constant 0 : index
      %c0_34 = arith.constant 0 : index
      %62 = vector.load %arg6[%c0_33, %c0_34] : memref<128x128xbf16, #tpu.memory_space<vmem>>, vector<128x128xbf16>
      %cst_35 = arith.constant dense<0.000000e+00> : vector<1x128xf32>
      %63 = tpu.matmul %61, %62, %cst_35 {dimension_numbers = #tpu.dot_dimension_numbers<[1], [0], [0], [1], [0, 0, 1, 1], [], []>} : vector<1x128xbf16>, vector<128x128xbf16>, vector<1x128xf32> -> vector<1x128xf32>
      %64 = vector.shape_cast %58 : vector<32x128xf32> to vector<1x32x128xf32>
      %65 = vector.shape_cast %63 : vector<1x128xf32> to vector<1x1x128xf32>
      %66 = vector.broadcast %65 : vector<1x1x128xf32> to vector<1x32x128xf32>
      %67 = arith.subf %64, %66 : vector<1x32x128xf32>
      %68 = vector.shape_cast %67 : vector<1x32x128xf32> to vector<32x128xf32>
      %69 = arith.truncf %68 : vector<32x128xf32> to vector<32x128xbf16>
      %c0_36 = arith.constant 0 : index
      %c0_37 = arith.constant 0 : index
      %70 = vector.load %arg10[%c0_36, %c0_37] : memref<32x128xbf16, #tpu.memory_space<vmem>>, vector<32x128xbf16>
      tpu.vector_store %arg10[%c0_36, %c0_37], %69 {strides = array<i32>} : memref<32x128xbf16, #tpu.memory_space<vmem>>, vector<32x128xbf16>,
      %cst_38 = arith.constant 0.000000e+00 : f32
      %71 = vector.broadcast %cst_38 : f32 to vector<32x128xf32>
      %c0_39 = arith.constant 0 : index
      %c0_40 = arith.constant 0 : index
      %72 = vector.load %arg11[%c0_39, %c0_40] : memref<32x128xf32, #tpu.memory_space<vmem>>, vector<32x128xf32>
      tpu.vector_store %arg11[%c0_39, %c0_40], %71 {strides = array<i32>} : memref<32x128xf32, #tpu.memory_space<vmem>>, vector<32x128xf32>,
    } else {
    }
    %c0 = arith.constant 0 : index
    %c0_1 = arith.constant 0 : index
    %c0_2 = arith.constant 0 : index
    %c0_3 = arith.constant 0 : index
    %3 = vector.load %arg5[%c0, %c0_1, %c0_2, %c0_3] : memref<1x1x64x128xbf16, #tpu.memory_space<vmem>>, vector<1x1x64x128xbf16>
    %4 = vector.shape_cast %3 : vector<1x1x64x128xbf16> to vector<64x128xbf16>
    %c0_4 = arith.constant 0 : index
    %c0_5 = arith.constant 0 : index
    %5 = vector.load %arg7[%c0_4, %c0_5] : memref<128x128xbf16, #tpu.memory_space<vmem>>, vector<128x128xbf16>
    %cst = arith.constant dense<0.000000e+00> : vector<64x128xf32>
    %6 = tpu.matmul %4, %5, %cst {dimension_numbers = #tpu.dot_dimension_numbers<[1], [0], [0], [1], [0, 0, 1, 1], [], []>} : vector<64x128xbf16>, vector<128x128xbf16>, vector<64x128xf32> -> vector<64x128xf32>
    %c0_6 = arith.constant 0 : index
    %c0_7 = arith.constant 0 : index
    %7 = vector.load %arg8[%c0_6, %c0_7] : memref<1x128xf32, #tpu.memory_space<vmem>>, vector<1x128xf32>
    %8 = vector.broadcast %7 : vector<1x128xf32> to vector<64x128xf32>
    %9 = arith.addf %6, %8 : vector<64x128xf32>
    %10 = arith.truncf %9 : vector<64x128xf32> to vector<64x128xbf16>
    %c0_8 = arith.constant 0 : index
    %c0_9 = arith.constant 0 : index
    %11 = vector.load %arg10[%c0_8, %c0_9] : memref<32x128xbf16, #tpu.memory_space<vmem>>, vector<32x128xbf16>
    %cst_10 = arith.constant dense<0.000000e+00> : vector<32x64xf32>
    %12 = tpu.matmul %11, %10, %cst_10 {dimension_numbers = #tpu.dot_dimension_numbers<[1], [1], [0], [0], [0, 0, 1, 0], [], []>} : vector<32x128xbf16>, vector<64x128xbf16>, vector<32x64xf32> -> vector<32x64xf32>
    %cst_11 = arith.constant 1.250000e-01 : f32
    %13 = vector.broadcast %cst_11 : f32 to vector<32x64xf32>
    %14 = arith.mulf %12, %13 : vector<32x64xf32>
    %cst_12 = arith.constant dense<0xFF800000> : vector<32xf32>
    %15 = vector.multi_reduction <maximumf>, %14, %cst_12 [1] : vector<32x64xf32> to vector<32xf32>
    %16 = vector.shape_cast %15 : vector<32xf32> to vector<32x1xf32>
    %17 = vector.broadcast %16 : vector<32x1xf32> to vector<32x64xf32>
    %18 = arith.subf %14, %17 : vector<32x64xf32>
    %19 = math.exp %18 : vector<32x64xf32>
    %cst_13 = arith.constant dense<0.000000e+00> : vector<32xf32>
    %20 = vector.multi_reduction <add>, %19, %cst_13 [1] : vector<32x64xf32> to vector<32xf32>
    %21 = vector.shape_cast %20 : vector<32xf32> to vector<32x1xf32>
    %22 = tpu.reciprocal %21 {approx = true} : vector<32x1xf32> -> vector<32x1xf32>
    %23 = vector.broadcast %22 : vector<32x1xf32> to vector<32x64xf32>
    %24 = arith.mulf %19, %23 : vector<32x64xf32>
    %25 = tpu.iota {dimensions = array<i32: 1>} : vector<1x128xi32>
    %c64_i32 = arith.constant 64 : i32
    %26 = vector.broadcast %c64_i32 : i32 to vector<1x128xi32>
    %27 = arith.cmpi eq, %25, %26 : vector<1x128xi32>
    %28 = arith.extui %27 : vector<1x128xi1> to vector<1x128xi32>
    %29 = arith.sitofp %28 : vector<1x128xi32> to vector<1x128xf32>
    %30 = arith.truncf %29 : vector<1x128xf32> to vector<1x128xbf16>
    %cst_14 = arith.constant dense<0.000000e+00> : vector<1x64xf32>
    %31 = tpu.matmul %30, %10, %cst_14 {dimension_numbers = #tpu.dot_dimension_numbers<[1], [1], [0], [0], [0, 0, 1, 0], [], []>} : vector<1x128xbf16>, vector<64x128xbf16>, vector<1x64xf32> -> vector<1x64xf32>
    %cst_15 = arith.constant dense<0xFF800000> : vector<1xf32>
    %32 = vector.multi_reduction <maximumf>, %31, %cst_15 [1] : vector<1x64xf32> to vector<1xf32>
    %33 = vector.shape_cast %32 : vector<1xf32> to vector<1x1xf32>
    %34 = vector.broadcast %33 : vector<1x1xf32> to vector<1x64xf32>
    %35 = arith.subf %31, %34 : vector<1x64xf32>
    %36 = math.exp %35 : vector<1x64xf32>
    %cst_16 = arith.constant dense<0.000000e+00> : vector<1xf32>
    %37 = vector.multi_reduction <add>, %36, %cst_16 [1] : vector<1x64xf32> to vector<1xf32>
    %38 = vector.shape_cast %37 : vector<1xf32> to vector<1x1xf32>
    %39 = tpu.reciprocal %38 {approx = true} : vector<1x1xf32> -> vector<1x1xf32>
    %40 = vector.broadcast %39 : vector<1x1xf32> to vector<1x64xf32>
    %41 = arith.mulf %36, %40 : vector<1x64xf32>
    %cst_17 = arith.constant 1.000000e-01 : f32
    %42 = vector.broadcast %cst_17 : f32 to vector<1x64xf32>
    %43 = arith.mulf %42, %41 : vector<1x64xf32>
    %44 = vector.broadcast %43 : vector<1x64xf32> to vector<32x64xf32>
    %45 = arith.addf %24, %44 : vector<32x64xf32>
    %46 = arith.truncf %45 : vector<32x64xf32> to vector<32x64xbf16>
    %c0_18 = arith.constant 0 : index
    %c0_19 = arith.constant 0 : index
    %47 = vector.load %arg11[%c0_18, %c0_19] : memref<32x128xf32, #tpu.memory_space<vmem>>, vector<32x128xf32>
    %cst_20 = arith.constant dense<0.000000e+00> : vector<32x128xf32>
    %48 = tpu.matmul %46, %4, %cst_20 {dimension_numbers = #tpu.dot_dimension_numbers<[1], [0], [0], [1], [0, 0, 1, 1], [], []>} : vector<32x64xbf16>, vector<64x128xbf16>, vector<32x128xf32> -> vector<32x128xf32>
    %49 = arith.addf %47, %48 : vector<32x128xf32>
    %c0_21 = arith.constant 0 : index
    %c0_22 = arith.constant 0 : index
    %50 = vector.load %arg11[%c0_21, %c0_22] : memref<32x128xf32, #tpu.memory_space<vmem>>, vector<32x128xf32>
    tpu.vector_store %arg11[%c0_21, %c0_22], %49 {strides = array<i32>} : memref<32x128xf32, #tpu.memory_space<vmem>>, vector<32x128xf32>,
    %c1_i32 = arith.constant 1 : i32
    %51 = arith.cmpi eq, %arg2, %c1_i32 : i32
    %52 = arith.extui %51 : i1 to i32
    %c0_i32_23 = arith.constant 0 : i32
    %53 = arith.cmpi ne, %52, %c0_i32_23 : i32
    scf.if %53 {
      %c0_24 = arith.constant 0 : index
      %c0_25 = arith.constant 0 : index
      %54 = vector.load %arg11[%c0_24, %c0_25] : memref<32x128xf32, #tpu.memory_space<vmem>>, vector<32x128xf32>
      %cst_26 = arith.constant 5.000000e-01 : f32
      %55 = vector.broadcast %cst_26 : f32 to vector<32x128xf32>
      %56 = arith.mulf %54, %55 : vector<32x128xf32>
      %c0_27 = arith.constant 0 : index
      %c0_28 = arith.constant 0 : index
      %c0_29 = arith.constant 0 : index
      %57 = vector.load %arg3[%c0_27, %c0_28, %c0_29] : memref<1x32x128xf32, #tpu.memory_space<vmem>>, vector<1x32x128xf32>
      %58 = vector.shape_cast %56 : vector<32x128xf32> to vector<1x32x128xf32>
      %59 = arith.mulf %57, %58 : vector<1x32x128xf32>
      %c0_30 = arith.constant 0 : index
      %c0_31 = arith.constant 0 : index
      %c0_32 = arith.constant 0 : index
      %60 = vector.load %arg9[%c0_30, %c0_31, %c0_32] : memref<1x32x128xf32, #tpu.memory_space<vmem>>, vector<1x32x128xf32>
      tpu.vector_store %arg9[%c0_30, %c0_31, %c0_32], %59 {strides = array<i32>} : memref<1x32x128xf32, #tpu.memory_space<vmem>>, vector<1x32x128xf32>,
    } else {
    }
    return
  }
  func.func @transform_0(%arg0: i32, %arg1: i32, %arg2: i32) -> (i32, i32, i32) {
    %c0_i32 = arith.constant 0 : i32
    %c0_i32_0 = arith.constant 0 : i32
    return %arg0, %arg1, %c0_i32 : i32, i32, i32
  }
  func.func @transform_1(%arg0: i32, %arg1: i32, %arg2: i32) -> (i32, i32, i32) {
    %c0_i32 = arith.constant 0 : i32
    %c0_i32_0 = arith.constant 0 : i32
    %c0_i32_1 = arith.constant 0 : i32
    return %arg0, %c0_i32, %c0_i32_0 : i32, i32, i32
  }
  func.func @transform_2(%arg0: i32, %arg1: i32, %arg2: i32) -> (i32, i32, i32, i32) {
    %c0_i32 = arith.constant 0 : i32
    %c0_i32_0 = arith.constant 0 : i32
    %c0_i32_1 = arith.constant 0 : i32
    return %arg0, %arg2, %c0_i32, %c0_i32_0 : i32, i32, i32, i32
  }
  func.func @transform_3(%arg0: i32, %arg1: i32, %arg2: i32) -> (i32, i32) {
    %c0_i32 = arith.constant 0 : i32
    %c0_i32_0 = arith.constant 0 : i32
    %c0_i32_1 = arith.constant 0 : i32
    return %c0_i32, %c0_i32_0 : i32, i32
  }
  func.func @transform_4(%arg0: i32, %arg1: i32, %arg2: i32) -> (i32, i32) {
    %c0_i32 = arith.constant 0 : i32
    %c0_i32_0 = arith.constant 0 : i32
    %c0_i32_1 = arith.constant 0 : i32
    return %c0_i32, %c0_i32_0 : i32, i32
  }
  func.func @transform_5(%arg0: i32, %arg1: i32, %arg2: i32) -> (i32, i32) {
    %c0_i32 = arith.constant 0 : i32
    %c0_i32_0 = arith.constant 0 : i32
    %c0_i32_1 = arith.constant 0 : i32
    return %c0_i32, %c0_i32_0 : i32, i32
  }
  func.func @transform_6(%arg0: i32, %arg1: i32, %arg2: i32) -> (i32, i32, i32) {
    %c0_i32 = arith.constant 0 : i32
    %c0_i32_0 = arith.constant 0 : i32
    return %arg0, %arg1, %c0_i32 : i32, i32, i32
  }
}

</mosaic_0001>

<llo_original>
// kernel: tpu_custom_call.1
$region0: #{tpu_custom_call.1}
  #allocation0 [shape = 'u32[]', space=smem, size = 0x4, offset = 0x4, fixed_abs, tag = 'smem constant byte address 0x4 - core index']
  #allocation1 [shape = 'u32[144,128]{1,0:T(1,128)}', space=vmem, size = 0x12000, scoped, tag = 'internal scratch']
  #allocation2 [shape = 'bf16[32,128]{1,0:T(16,128)(2,1)}', space=vmem, size = 0x2000, scoped, tag = 'scratch operand']
  #allocation3 [shape = 'f32[32,128]{1,0:T(8,128)}', space=vmem, size = 0x4000, scoped, tag = 'scratch operand']
  %s0 = inlined_call_operand.hbm [shape: f32[2,64,128], index: 0, kind: input, shape index: {}]
  %s1 = inlined_call_operand.vmem [shape: f32[2,1,128], index: 1, kind: input, shape index: {}]
  %s2 = inlined_call_operand.hbm [shape: bf16[2,2,64,128], index: 2, kind: input, shape index: {}]
  %s3 = inlined_call_operand.hbm [shape: bf16[128,128], index: 3, kind: input, shape index: {}]
  %s4 = inlined_call_operand.hbm [shape: bf16[128,128], index: 4, kind: input, shape index: {}]
  %s5 = inlined_call_operand.vmem [shape: f32[1,128], index: 5, kind: input, shape index: {}]
  %s6 = inlined_call_operand.hbm [shape: f32[2,64,128], index: 6, kind: output, shape index: {}]
  %s7 = sld [smem:[#allocation0]]
  $region81: #{tpu_custom_call.1} parent=0
    _
  %s9 = ssub.s32 1, %s7
  %s10 = scalar_select 0, %s9, %s7
  $region1: #{tpu_custom_call.1} parent=0
    #allocation4 [shape = 'u8[32768]{0}', space=vmem, size = 0x8000, scoped, tag = 'input window, operand 0']
    #allocation5 [shape = 's32[2]{0}', space=sflag, size = 0x8, scoped, tag = 'scoped memory for tpu_custom_call.1']
    #allocation6 [shape = 's32[2]{0}', space=sflag, size = 0x8, scoped, tag = 'scoped memory for tpu_custom_call.1']
    #allocation7 [shape = 'u8[32768]{0}', space=vmem, size = 0x8000, scoped, tag = 'input window, operand 2']
    #allocation8 [shape = 's32[2]{0}', space=sflag, size = 0x8, scoped, tag = 'scoped memory for tpu_custom_call.1']
    #allocation9 [shape = 'u8[32768]{0}', space=vmem, size = 0x8000, scoped, tag = 'input window, operand 3, single buffered']
    #allocation10 [shape = 'u8[32768]{0}', space=vmem, size = 0x8000, scoped, tag = 'input window, operand 4, single buffered']
    #allocation11 [shape = 's32[1]{0}', space=sflag, size = 0x4, scoped, tag = 'scoped memory for tpu_custom_call.1']
    #allocation12 [shape = 'u8[32768]{0}', space=vmem, size = 0x8000, scoped, tag = 'output window, operand 0']
    %11 = vsyncpa [#allocation5], 0
    %s12 = scalar_lea.sflag [#allocation5], 1
    %13 = vsyncpa %s12, 0
    %14 = vsyncpa [#allocation8], 0
    %s15 = scalar_lea.sflag [#allocation8], 1
    %16 = vsyncpa %s15, 0
    %17 = vsyncpa [#allocation11], 0
    %18 = vsyncpa [#allocation6], 0
    %s19 = scalar_lea.sflag [#allocation6], 1
    %20 = vsyncpa %s19, 0
    loop: start=0, step=1, limit=10
    $region2: #{tpu_custom_call.1} parent=1 // loop_pre_header
      _
    $region3: #{tpu_custom_call.1} parent=1 // loop_header
      %s22 = sphi 0, %s26
      %p23 = scmp.ge.s32.totalorder %s22, 10
      %s29 = sphi 0, %s48
      %s30 = sphi 0, %s44
      %s31 = sphi 0, %s40
      %s32 = sphi 0, %s29
      %s33 = sphi 0, %s30
      %s34 = sphi 0, %s31
      %s35 = sphi 0, %s32
      %s36 = sphi 0, %s33
      %s37 = sphi 0, %s34
      %s53 = sphi 0, %s55
      %s56 = sphi 0, %s53
      %s57 = sphi 0, %s56
      %s73 = sphi 0, %s57
      %s79 = sphi 0, %s81
      %s82 = sphi 0, %s79
      %s83 = sphi 0, %s82
      %s99 = sphi 0, %s83
      %s107 = sphi 0, %s109
      %s110 = sphi 0, %s107
      %s111 = sphi 0, %s110
      %s127 = sphi 0, %s111
      %s131 = sphi 0, %s131
      %s133 = sphi 0, %s131
      %s134 = sphi 0, %s133
      %s148 = sphi 0, %s134
      %s152 = sphi 0, %s152
      %s154 = sphi 0, %s152
      %s155 = sphi 0, %s154
      %s169 = sphi 0, %s155
      %s173 = sphi 0, %s173
      %s175 = sphi 0, %s173
      %s176 = sphi 0, %s175
      %s190 = sphi 0, %s176
      %s198 = sphi 0, %s200
      %s201 = sphi 0, %s198
      %s202 = sphi 0, %s201
      %s218 = sphi 0, %s202
    $region4: #{tpu_custom_call.1} parent=1 // loop_header_branch
      %25 = sbr.rel (%p23) target = $region8
    $region5: #{tpu_custom_call.1} parent=1 // loop_body
      %s27 = ssub.s32 %s22, 1
      %s28 = ssub.s32 %s22, 2
      %s38 = sadd.s32 1, %s31
      %p39 = scmp.ge.s32.totalorder %s38, 2
      %s40 = scalar_select %p39, 0, %s38
      %s41 = sadd.s32 1, %s30
      %s42 = scalar_select %p39, %s41, %s30
      %p43 = scmp.ge.s32.totalorder %s42, 2
      %s44 = scalar_select %p43, 0, %s42
      %s45 = sadd.s32 1, %s29
      %s46 = scalar_select %p43, %s45, %s29
      %p47 = scmp.ge.s32.totalorder %s46, 2
      %s48 = scalar_select %p47, 0, %s46
      %s49 = ssub.s32 %s29, %s48
      %s50 = ssub.s32 %s30, %s44
      %s51 = sor.u32 %s49, %s50
      %p52 = scmp.eq.s32.totalorder %s51, 0
      %s54 = sadd.s32 %s53, 1
      %s55 = scalar_select %p52, %s53, %s54
      %p58 = pneg %p52
      %p59 = scmp.eq.s32.totalorder %s22, 7
      %p60 = por %p58, %p59
      %p61 = scmp.ne.s32.totalorder %s53, %s56
      %p62 = scmp.eq.s32.totalorder %s22, 0
      %p63 = por %p61, %p62
      %p64 = scmp.ne.s32.totalorder %s53, %s56
      %p65 = scmp.eq.s32.totalorder %s27, 7
      %p66 = por %p64, %p65
      %p67 = scmp.ne.s32.totalorder %s56, %s57
      %p68 = scmp.eq.s32.totalorder %s27, 0
      %p69 = por %p67, %p68
      %p70 = scmp.ne.s32.totalorder %s56, %s57
      %p71 = scmp.eq.s32.totalorder %s28, 7
      %p72 = por %p70, %p71
      %p74 = scmp.ne.s32.totalorder %s57, %s73
      %p75 = scmp.eq.s32.totalorder %s28, 0
      %p76 = por %p74, %p75
      %s77 = ssub.s32 %s29, %s48
      %p78 = scmp.eq.s32.totalorder %s77, 0
      %s80 = sadd.s32 %s79, 1
      %s81 = scalar_select %p78, %s79, %s80
      %p84 = pneg %p78
      %p85 = scmp.eq.s32.totalorder %s22, 7
      %p86 = por %p84, %p85
      %p87 = scmp.ne.s32.totalorder %s79, %s82
      %p88 = scmp.eq.s32.totalorder %s22, 0
      %p89 = por %p87, %p88
      %p90 = scmp.ne.s32.totalorder %s79, %s82
      %p91 = scmp.eq.s32.totalorder %s27, 7
      %p92 = por %p90, %p91
      %p93 = scmp.ne.s32.totalorder %s82, %s83
      %p94 = scmp.eq.s32.totalorder %s27, 0
      %p95 = por %p93, %p94
      %p96 = scmp.ne.s32.totalorder %s82, %s83
      %p97 = scmp.eq.s32.totalorder %s28, 7
      %p98 = por %p96, %p97
      %p100 = scmp.ne.s32.totalorder %s83, %s99
      %p101 = scmp.eq.s32.totalorder %s28, 0
      %p102 = por %p100, %p101
      %s103 = ssub.s32 %s29, %s48
      %s104 = ssub.s32 %s31, %s40
      %s105 = sor.u32 %s103, %s104
      %p106 = scmp.eq.s32.totalorder %s105, 0
      %s108 = sadd.s32 %s107, 1
      %s109 = scalar_select %p106, %s107, %s108
      %p112 = pneg %p106
      %p113 = scmp.eq.s32.totalorder %s22, 7
      %p114 = por %p112, %p113
      %p115 = scmp.ne.s32.totalorder %s107, %s110
      %p116 = scmp.eq.s32.totalorder %s22, 0
      %p117 = por %p115, %p116
      %p118 = scmp.ne.s32.totalorder %s107, %s110
      %p119 = scmp.eq.s32.totalorder %s27, 7
      %p120 = por %p118, %p119
      %p121 = scmp.ne.s32.totalorder %s110, %s111
      %p122 = scmp.eq.s32.totalorder %s27, 0
      %p123 = por %p121, %p122
      %p124 = scmp.ne.s32.totalorder %s110, %s111
      %p125 = scmp.eq.s32.totalorder %s28, 7
      %p126 = por %p124, %p125
      %p128 = scmp.ne.s32.totalorder %s111, %s127
      %p129 = scmp.eq.s32.totalorder %s28, 0
      %p130 = por %p128, %p129
      %s132 = sadd.s32 %s131, 1
      %p135 = scmp.eq.s32.totalorder %s22, 7
      %p136 = scmp.ne.s32.totalorder %s131, %s133
      %p137 = scmp.eq.s32.totalorder %s22, 0
      %p138 = por %p136, %p137
      %p139 = scmp.ne.s32.totalorder %s131, %s133
      %p140 = scmp.eq.s32.totalorder %s27, 7
      %p141 = por %p139, %p140
      %p142 = scmp.ne.s32.totalorder %s133, %s134
      %p143 = scmp.eq.s32.totalorder %s27, 0
      %p144 = por %p142, %p143
      %p145 = scmp.ne.s32.totalorder %s133, %s134
      %p146 = scmp.eq.s32.totalorder %s28, 7
      %p147 = por %p145, %p146
      %p149 = scmp.ne.s32.totalorder %s134, %s148
      %p150 = scmp.eq.s32.totalorder %s28, 0
      %p151 = por %p149, %p150
      %s153 = sadd.s32 %s152, 1
      %p156 = scmp.eq.s32.totalorder %s22, 7
      %p157 = scmp.ne.s32.totalorder %s152, %s154
      %p158 = scmp.eq.s32.totalorder %s22, 0
      %p159 = por %p157, %p158
      %p160 = scmp.ne.s32.totalorder %s152, %s154
      %p161 = scmp.eq.s32.totalorder %s27, 7
      %p162 = por %p160, %p161
      %p163 = scmp.ne.s32.totalorder %s154, %s155
      %p164 = scmp.eq.s32.totalorder %s27, 0
      %p165 = por %p163, %p164
      %p166 = scmp.ne.s32.totalorder %s154, %s155
      %p167 = scmp.eq.s32.totalorder %s28, 7
      %p168 = por %p166, %p167
      %p170 = scmp.ne.s32.totalorder %s155, %s169
      %p171 = scmp.eq.s32.totalorder %s28, 0
      %p172 = por %p170, %p171
      %s174 = sadd.s32 %s173, 1
      %p177 = scmp.eq.s32.totalorder %s22, 7
      %p178 = scmp.ne.s32.totalorder %s173, %s175
      %p179 = scmp.eq.s32.totalorder %s22, 0
      %p180 = por %p178, %p179
      %p181 = scmp.ne.s32.totalorder %s173, %s175
      %p182 = scmp.eq.s32.totalorder %s27, 7
      %p183 = por %p181, %p182
      %p184 = scmp.ne.s32.totalorder %s175, %s176
      %p185 = scmp.eq.s32.totalorder %s27, 0
      %p186 = por %p184, %p185
      %p187 = scmp.ne.s32.totalorder %s175, %s176
      %p188 = scmp.eq.s32.totalorder %s28, 7
      %p189 = por %p187, %p188
      %p191 = scmp.ne.s32.totalorder %s176, %s190
      %p192 = scmp.eq.s32.totalorder %s28, 0
      %p193 = por %p191, %p192
      %s194 = ssub.s32 %s29, %s48
      %s195 = ssub.s32 %s30, %s44
      %s196 = sor.u32 %s194, %s195
      %p197 = scmp.eq.s32.totalorder %s196, 0
      %s199 = sadd.s32 %s198, 1
      %s200 = scalar_select %p197, %s198, %s199
      %p203 = pneg %p197
      %p204 = scmp.eq.s32.totalorder %s22, 7
      %p205 = por %p203, %p204
      %p206 = scmp.ne.s32.totalorder %s198, %s201
      %p207 = scmp.eq.s32.totalorder %s22, 0
      %p208 = por %p206, %p207
      %p209 = scmp.ne.s32.totalorder %s198, %s201
      %p210 = scmp.eq.s32.totalorder %s27, 7
      %p211 = por %p209, %p210
      %p212 = scmp.ne.s32.totalorder %s201, %s202
      %p213 = scmp.eq.s32.totalorder %s27, 0
      %p214 = por %p212, %p213
      %p215 = scmp.ne.s32.totalorder %s201, %s202
      %p216 = scmp.eq.s32.totalorder %s28, 7
      %p217 = por %p215, %p216
      %p219 = scmp.ne.s32.totalorder %s202, %s218
      %p220 = scmp.eq.s32.totalorder %s28, 0
      %p221 = por %p219, %p220
      %p222 = scmp.le.s32.totalorder 1, %s22
      %p223 = scmp.lt.s32.totalorder %s22, 9
      %p224 = pnand %p222, %p223
      %p225 = pneg %p224
      // Predicated region
      $region9: #{tpu_custom_call.1} parent=5 // pred_check
        _
      $region10: #{tpu_custom_call.1} parent=5 // pred_check_branch
        %227 = sbr.rel (%p224) target = $region12
      $region11: #{tpu_custom_call.1} parent=5 // pred_region
        %s228 = ssub.s32 %s22, 1
        // Predicated region
        $region13: #{tpu_custom_call.1} parent=11 // pred_check
          %p229 = pneg %p144
        $region14: #{tpu_custom_call.1} parent=11 // pred_check_branch
          %231 = sbr.rel (%p229) target = $region16
        $region15: #{tpu_custom_call.1} parent=11 // pred_region
          %s233 = ssub.s32 1024, 1024
          %234 = vsyncadd [#allocation8], %s233
          %s235 = sshll.u32 [#allocation9], 4
          %s236 = int_to_ptr.vmem [resolvable:$true] %s235
          %241 = dma.hbm_to_vmem [thread:$0]  %s3, 1024, %s236, [#allocation8], 64, 64, 4
        $region16: #{tpu_custom_call.1} parent=11 // pred_fallthru
          _
        // Predicated region
        $region17: #{tpu_custom_call.1} parent=11 // pred_check
          %p242 = pneg %p165
        $region18: #{tpu_custom_call.1} parent=11 // pred_check_branch
          %244 = sbr.rel (%p242) target = $region20
        $region19: #{tpu_custom_call.1} parent=11 // pred_region
          %s246 = ssub.s32 1024, 1024
          %247 = vsyncadd [#allocation11], %s246
          %s248 = sshll.u32 [#allocation10], 4
          %s249 = int_to_ptr.vmem [resolvable:$true] %s248
          %254 = dma.hbm_to_vmem [thread:$0]  %s4, 1024, %s249, [#allocation11], 64, 64, 4
        $region20: #{tpu_custom_call.1} parent=11 // pred_fallthru
          _
        // Predicated region
        $region21: #{tpu_custom_call.1} parent=11 // pred_check
          %p255 = pneg %p186
        $region22: #{tpu_custom_call.1} parent=11 // pred_check_branch
          %257 = sbr.rel (%p255) target = $region24
        $region23: #{tpu_custom_call.1} parent=11 // pred_region
          _
        $region24: #{tpu_custom_call.1} parent=11 // pred_fallthru
          _
      $region12: #{tpu_custom_call.1} parent=5 // pred_fallthru
        _
      %p258 = scmp.lt.s32.totalorder %s22, 8
      // Predicated region
      $region25: #{tpu_custom_call.1} parent=5 // pred_check
        %p259 = pneg %p258
      $region26: #{tpu_custom_call.1} parent=5 // pred_check_branch
        %261 = sbr.rel (%p259) target = $region28
      $region27: #{tpu_custom_call.1} parent=5 // pred_region
        // Predicated region
        $region29: #{tpu_custom_call.1} parent=27 // pred_check
          %p262 = pneg %p63
        $region30: #{tpu_custom_call.1} parent=27 // pred_check_branch
          %264 = sbr.rel (%p262) target = $region32
        $region31: #{tpu_custom_call.1} parent=27 // pred_region
          %s265 = sand.u32 %s53, 1
          %s266 = scalar_lea.sflag [#allocation5], %s265
          %s267 = sand.u32 %s53, 1
          %s268 = smul.addr %s267, 32
          %s269 = scalar_lea.vmem [#allocation4], %s268
          %s270 = smul.u32 4, %s30
          %s272 = ssub.s32 512, 512
          %273 = vsyncadd %s266, %s272
          %s274 = smul.addr %s29, 8
          %s275 = sadd.s32 %s270, %s274
          %s276 = smul.addr %s275, 128
          %s277 = scalar_lea.hbm %s0, %s276
          %s278 = sshll.u32 %s269, 4
          %s279 = int_to_ptr.vmem [resolvable:$true] %s278
          %284 = dma.hbm_to_vmem [thread:$0]  %s277, 512, %s279, %s266, 128, 128, 8
        $region32: #{tpu_custom_call.1} parent=27 // pred_fallthru
          _
        // Predicated region
        $region33: #{tpu_custom_call.1} parent=27 // pred_check
          %p285 = pneg %p89
        $region34: #{tpu_custom_call.1} parent=27 // pred_check_branch
          %287 = sbr.rel (%p285) target = $region36
        $region35: #{tpu_custom_call.1} parent=27 // pred_region
          %p288 = scmp.lt.s32.totalorder %s29, 1
          %s289 = scalar_select %p288, %s29, 1
          %s290 = scalar_lea.vmem %s1, %s289
        $region36: #{tpu_custom_call.1} parent=27 // pred_fallthru
          _
        // Predicated region
        $region37: #{tpu_custom_call.1} parent=27 // pred_check
          %p291 = pneg %p117
        $region38: #{tpu_custom_call.1} parent=27 // pred_check_branch
          %293 = sbr.rel (%p291) target = $region40
        $region39: #{tpu_custom_call.1} parent=27 // pred_region
          %s294 = sand.u32 %s22, 1
          %s295 = scalar_lea.sflag [#allocation8], %s294
          %s296 = sand.u32 %s107, 1
          %s297 = smul.addr %s296, 32
          %s298 = scalar_lea.vmem [#allocation7], %s297
          %s300 = ssub.s32 512, 512
          %301 = vsyncadd %s295, %s300
          %s302 = smul.addr %s31, 8
          %s303 = smul.addr %s29, 16
          %s304 = sadd.s32 %s302, %s303
          %s305 = smul.addr %s304, 64
          %s306 = scalar_lea.hbm %s2, %s305
          %s307 = sshll.u32 %s298, 4
          %s308 = int_to_ptr.vmem [resolvable:$true] %s307
          %313 = dma.hbm_to_vmem [thread:$0]  %s306, 512, %s308, %s295, 64, 64, 4
        $region40: #{tpu_custom_call.1} parent=27 // pred_fallthru
          _
      $region28: #{tpu_custom_call.1} parent=5 // pred_fallthru
        _
      %p314 = scmp.le.s32.totalorder 1, %s22
      %p315 = scmp.lt.s32.totalorder %s22, 9
      %p316 = pnand %p314, %p315
      %p317 = pneg %p316
      // Predicated region
      $region41: #{tpu_custom_call.1} parent=5 // pred_check
        _
      $region42: #{tpu_custom_call.1} parent=5 // pred_check_branch
        %319 = sbr.rel (%p316) target = $region44
      $region43: #{tpu_custom_call.1} parent=5 // pred_region
        %s320 = ssub.s32 %s22, 1
        %s321 = sand.u32 %s56, 1
        %s322 = scalar_lea.sflag [#allocation5], %s321
        %s323 = sand.u32 %s56, 1
        %s324 = smul.addr %s323, 32
        %s325 = scalar_lea.vmem [#allocation4], %s324
        // Predicated region
        $region45: #{tpu_custom_call.1} parent=43 // pred_check
          %p326 = pneg %p69
        $region46: #{tpu_custom_call.1} parent=43 // pred_check_branch
          %328 = sbr.rel (%p326) target = $region48
        $region47: #{tpu_custom_call.1} parent=43 // pred_region
          %329 = dma.done %s322, 512
        $region48: #{tpu_custom_call.1} parent=43 // pred_fallthru
          _
        %s330 = sand.u32 %s27, 1
        %s331 = scalar_lea.sflag [#allocation8], %s330
        %s332 = sand.u32 %s110, 1
        %s333 = smul.addr %s332, 32
        %s334 = scalar_lea.vmem [#allocation7], %s333
        // Predicated region
        $region49: #{tpu_custom_call.1} parent=43 // pred_check
          %p335 = pneg %p123
        $region50: #{tpu_custom_call.1} parent=43 // pred_check_branch
          %337 = sbr.rel (%p335) target = $region52
        $region51: #{tpu_custom_call.1} parent=43 // pred_region
          %338 = dma.done %s331, 512
        $region52: #{tpu_custom_call.1} parent=43 // pred_fallthru
          _
        // Predicated region
        $region53: #{tpu_custom_call.1} parent=43 // pred_check
          %p339 = pneg %p144
        $region54: #{tpu_custom_call.1} parent=43 // pred_check_branch
          %341 = sbr.rel (%p339) target = $region56
        $region55: #{tpu_custom_call.1} parent=43 // pred_region
          %342 = dma.done [#allocation8], 1024
        $region56: #{tpu_custom_call.1} parent=43 // pred_fallthru
          _
        // Predicated region
        $region57: #{tpu_custom_call.1} parent=43 // pred_check
          %p343 = pneg %p165
        $region58: #{tpu_custom_call.1} parent=43 // pred_check_branch
          %345 = sbr.rel (%p343) target = $region60
        $region59: #{tpu_custom_call.1} parent=43 // pred_region
          %346 = dma.done [#allocation11], 1024
        $region60: #{tpu_custom_call.1} parent=43 // pred_fallthru
          _
        %s347 = sand.u32 %s56, 1
        %s348 = scalar_lea.sflag [#allocation5], %s347
        %s349 = sand.u32 %s56, 1
        %s350 = smul.addr %s349, 32
        %s351 = scalar_lea.vmem [#allocation4], %s350
        %p352 = pneg %p69
        %p353 = pneg %p66
        %p354 = scmp.lt.s32.totalorder %s32, 1
        %s355 = scalar_select %p354, %s32, 1
        %s356 = scalar_lea.vmem %s1, %s355
        %p357 = pneg %p95
        %p358 = pneg %p92
        %s359 = sand.u32 %s27, 1
        %s360 = scalar_lea.sflag [#allocation8], %s359
        %s361 = sand.u32 %s110, 1
        %s362 = smul.addr %s361, 32
        %s363 = scalar_lea.vmem [#allocation7], %s362
        %p364 = pneg %p123
        %p365 = pneg %p120
        %p366 = pneg %p144
        %p367 = pneg %p141
        %p368 = pneg %p165
        %p369 = pneg %p162
        %p370 = pneg %p186
        %p371 = pneg %p183
        %p372 = pneg %p214
        %p373 = pneg %p211
        %s374 = sand.u32 %s201, 1
        %s375 = scalar_lea.sflag [#allocation6], %s374
        %s376 = sand.u32 %s201, 1
        %s377 = smul.addr %s376, 32
        %s378 = scalar_lea.vmem [#allocation12], %s377
        %s379 = smul.u32 4, %s33
        %p380 = scmp.lt.s32.totalorder %s32, 1
        %s381 = scalar_select %p380, %s32, 1
        %s382 = scalar_lea.vmem %s1, %s381
        %s383 = smul.u32 4, %s33
        %p385 = scmp.eq.s32.totalorder %s34, 0
        // Predicated region
        $region61: #{tpu_custom_call.1} parent=43 // pred_check
          %p386 = pneg %p385
        $region62: #{tpu_custom_call.1} parent=43 // pred_check_branch
          %388 = sbr.rel (%p386) target = $region64
        $region63: #{tpu_custom_call.1} parent=43 // pred_region
          %v389 = vld [vmem:[%s325] sm:$0xff]
          %v390 = vld [vmem:[%s325 + $0x8] sm:$0xff]
          %v391 = vld [vmem:[%s325 + $0x10] sm:$0xff]
          %v392 = vld [vmem:[%s325 + $0x18] sm:$0xff]
          %v393 = vpack.c.bf16 %v390, %v389
          %v394 = vpack.c.bf16 %v392, %v391
          %v395 = vld [vmem:[#allocation9] sm:$0xf]
          %v396 = vld [vmem:[#allocation9 + $0x4] sm:$0xf]
          %v397 = vld [vmem:[#allocation9 + $0x8] sm:$0xf]
          %v398 = vld [vmem:[#allocation9 + $0xc] sm:$0xf]
          %v399 = vld [vmem:[#allocation9 + $0x10] sm:$0xf]
          %v400 = vld [vmem:[#allocation9 + $0x14] sm:$0xf]
          %v401 = vld [vmem:[#allocation9 + $0x18] sm:$0xf]
          %v402 = vld [vmem:[#allocation9 + $0x1c] sm:$0xf]
          %v403 = vld [vmem:[#allocation9 + $0x20] sm:$0xf]
          %v404 = vld [vmem:[#allocation9 + $0x24] sm:$0xf]
          %v405 = vld [vmem:[#allocation9 + $0x28] sm:$0xf]
          %v406 = vld [vmem:[#allocation9 + $0x2c] sm:$0xf]
          %v407 = vld [vmem:[#allocation9 + $0x30] sm:$0xf]
          %v408 = vld [vmem:[#allocation9 + $0x34] sm:$0xf]
          %v409 = vld [vmem:[#allocation9 + $0x38] sm:$0xf]
          %v410 = vld [vmem:[#allocation9 + $0x3c] sm:$0xf]
          %v427 = vunpack.c.l.b16 %v395
          %v428 = vunpack.c.l.b16 %v396
          %v429 = vunpack.c.l.b16 %v397
          %v430 = vunpack.c.l.b16 %v398
          %v431 = vunpack.c.l.b16 %v399
          %v432 = vunpack.c.l.b16 %v400
          %v433 = vunpack.c.l.b16 %v401
          %v434 = vunpack.c.l.b16 %v402
          %v435 = vunpack.c.l.b16 %v403
          %v436 = vunpack.c.l.b16 %v404
          %v437 = vunpack.c.l.b16 %v405
          %v438 = vunpack.c.l.b16 %v406
          %v439 = vunpack.c.l.b16 %v407
          %v440 = vunpack.c.l.b16 %v408
          %v441 = vunpack.c.l.b16 %v409
          %v442 = vunpack.c.l.b16 %v410
          %v443 = vpack.c.b16 %v428, %v427
          %v444 = vpack.c.b16 %v430, %v429
          %v445 = vpack.c.b16 %v432, %v431
          %v446 = vpack.c.b16 %v434, %v433
          %v447 = vpack.c.b16 %v436, %v435
          %v448 = vpack.c.b16 %v438, %v437
          %v449 = vpack.c.b16 %v440, %v439
          %v450 = vpack.c.b16 %v442, %v441
          %459 = vmatprep.subr.bf16.mxu0 0
          %460 = vmatpush1.bf16.msra.mxu0 %v443
          %461 = vmatprep.subr.bf16.mxu0 0
          %462 = vmatpush1.bf16.msra.mxu0 %v444
          %463 = vmatprep.subr.bf16.mxu0 0
          %464 = vmatpush1.bf16.msra.mxu0 %v445
          %465 = vmatprep.subr.bf16.mxu0 0
          %466 = vmatpush1.bf16.msra.mxu0 %v446
          %467 = vmatprep.subr.bf16.mxu0 0
          %468 = vmatpush1.bf16.msra.mxu0 %v447
          %469 = vmatprep.subr.bf16.mxu0 0
          %470 = vmatpush1.bf16.msra.mxu0 %v448
          %471 = vmatprep.subr.bf16.mxu0 0
          %472 = vmatpush1.bf16.msra.mxu0 %v449
          %473 = vmatprep.subr.bf16.mxu0 0
          %474 = vmatpush1.bf16.msra.mxu0 %v450
          %475 = vmatprep.subr.bf16.mxu0 0
          %476 = vmatpush1.bf16.msra.mxu0 0
          %477 = vmatprep.subr.bf16.mxu0 0
          %478 = vmatpush1.bf16.msra.mxu0 0
          %479 = vmatprep.subr.bf16.mxu0 0
          %480 = vmatpush1.bf16.msra.mxu0 0
          %481 = vmatprep.subr.bf16.mxu0 0
          %482 = vmatpush1.bf16.msra.mxu0 0
          %483 = vmatprep.subr.bf16.mxu0 0
          %484 = vmatpush1.bf16.msra.mxu0 0
          %485 = vmatprep.subr.bf16.mxu0 0
          %486 = vmatpush1.bf16.msra.mxu0 0
          %487 = vmatprep.subr.bf16.mxu0 0
          %488 = vmatpush1.bf16.msra.mxu0 0
          %489 = vmatprep.subr.bf16.mxu0 0
          %490 = vmatpush1.bf16.msra.mxu0 0
          %491 = vmatprep.mubr.bf16.mxu0 0
          %492 = vmatmul.mubr.bf16.gmra.mrb[0].mxu0 %v393
          %v493 = vpop.f32.mrb[0].mxu0
          %v494 = vadd.f32 0.0, %v493
          %v495 = vpop.f32.mrb[0].mxu0
          %v496 = vpop.f32.mrb[0].mxu0
          %v497 = vadd.f32 0.0, %v496
          %v498 = vpop.f32.mrb[0].mxu0
          %499 = vmatprep.mubr.bf16.mxu0 0
          %500 = vmatmul.mubr.bf16.gmra.mrb[0].mxu0 %v394
          %v501 = vpop.f32.mrb[0].mxu0
          %v502 = vadd.f32 0.0, %v501
          %v503 = vpop.f32.mrb[0].mxu0
          %v504 = vpop.f32.mrb[0].mxu0
          %v505 = vadd.f32 0.0, %v504
          %v506 = vpop.f32.mrb[0].mxu0
          %507 = vdwg.mxu0
          %v508 = vld [vmem:[%s382] sm:$0x1]
          %v509 = vpack.c.bf16 %v508, %v508
          %510 = vmatprep.subr.bf16.mxu0 0
          %511 = vmatpush1.bf16.msra.mxu0 %v443
          %512 = vmatprep.subr.bf16.mxu0 0
          %513 = vmatpush1.bf16.msra.mxu0 %v444
          %514 = vmatprep.subr.bf16.mxu0 0
          %515 = vmatpush1.bf16.msra.mxu0 %v445
          %516 = vmatprep.subr.bf16.mxu0 0
          %517 = vmatpush1.bf16.msra.mxu0 %v446
          %518 = vmatprep.subr.bf16.mxu0 0
          %519 = vmatpush1.bf16.msra.mxu0 %v447
          %520 = vmatprep.subr.bf16.mxu0 0
          %521 = vmatpush1.bf16.msra.mxu0 %v448
          %522 = vmatprep.subr.bf16.mxu0 0
          %523 = vmatpush1.bf16.msra.mxu0 %v449
          %524 = vmatprep.subr.bf16.mxu0 0
          %525 = vmatpush1.bf16.msra.mxu0 %v450
          %526 = vmatprep.subr.bf16.mxu0 0
          %527 = vmatpush1.bf16.msra.mxu0 0
          %528 = vmatprep.subr.bf16.mxu0 0
          %529 = vmatpush1.bf16.msra.mxu0 0
          %530 = vmatprep.subr.bf16.mxu0 0
          %531 = vmatpush1.bf16.msra.mxu0 0
          %532 = vmatprep.subr.bf16.mxu0 0
          %533 = vmatpush1.bf16.msra.mxu0 0
          %534 = vmatprep.subr.bf16.mxu0 0
          %535 = vmatpush1.bf16.msra.mxu0 0
          %536 = vmatprep.subr.bf16.mxu0 0
          %537 = vmatpush1.bf16.msra.mxu0 0
          %538 = vmatprep.subr.bf16.mxu0 0
          %539 = vmatpush1.bf16.msra.mxu0 0
          %540 = vmatprep.subr.bf16.mxu0 0
          %541 = vmatpush1.bf16.msra.mxu0 0
          %542 = vmatprep.mubr.bf16.mxu0 0
          %543 = vmatmul.mubr.bf16.gmra.mrb[0].mxu0 %v509
          %v544 = vpop.f32.mrb[0].mxu0
          %v545 = vadd.f32 0.0, %v544
          %v546 = vpop.f32.mrb[0].mxu0
          %v547 = vpop.f32.mrb[0].mxu0
          %v548 = vpop.f32.mrb[0].mxu0
          %549 = vdwg.mxu0
          %v550 = vlaneseq
          %v551 = vshrl.u32 %v550, 7
          %v552 = vsub.s32 0, %v551
          %v553 = vrot.slane %v545, %v552
          %v554 = vsub.f32 %v494, %v553
          %v555 = vsub.f32 %v497, %v553
          %v556 = vsub.f32 %v502, %v553
          %v557 = vsub.f32 %v505, %v553
          %v558 = vpack.c.bf16 %v555, %v554
          %v559 = vpack.c.bf16 %v557, %v556
          %560 = vst [vmem:[#allocation2] sm:$0xff] %v558
          %561 = vst [vmem:[#allocation2 + $0x8] sm:$0xff] %v559
          %562 = vst [vmem:[#allocation3] sm:$0xff] 0.0
          %563 = vst [vmem:[#allocation3 + $0x8] sm:$0xff] 0.0
          %564 = vst [vmem:[#allocation3 + $0x10] sm:$0xff] 0.0
          %565 = vst [vmem:[#allocation3 + $0x18] sm:$0xff] 0.0
        $region64: #{tpu_custom_call.1} parent=43 // pred_fallthru
          _
        %v566 = vld [vmem:[%s334] sm:$0xf]
        %v567 = vld [vmem:[%s334 + $0x4] sm:$0xf]
        %v568 = vld [vmem:[%s334 + $0x8] sm:$0xf]
        %v569 = vld [vmem:[%s334 + $0xc] sm:$0xf]
        %v570 = vld [vmem:[%s334 + $0x10] sm:$0xf]
        %v571 = vld [vmem:[%s334 + $0x14] sm:$0xf]
        %v572 = vld [vmem:[%s334 + $0x18] sm:$0xf]
        %v573 = vld [vmem:[%s334 + $0x1c] sm:$0xf]
        %v574 = vld [vmem:[#allocation10] sm:$0xf]
        %v575 = vld [vmem:[#allocation10 + $0x4] sm:$0xf]
        %v576 = vld [vmem:[#allocation10 + $0x8] sm:$0xf]
        %v577 = vld [vmem:[#allocation10 + $0xc] sm:$0xf]
        %v578 = vld [vmem:[#allocation10 + $0x10] sm:$0xf]
        %v579 = vld [vmem:[#allocation10 + $0x14] sm:$0xf]
        %v580 = vld [vmem:[#allocation10 + $0x18] sm:$0xf]
        %v581 = vld [vmem:[#allocation10 + $0x1c] sm:$0xf]
        %v582 = vld [vmem:[#allocation10 + $0x20] sm:$0xf]
        %v583 = vld [vmem:[#allocation10 + $0x24] sm:$0xf]
        %v584 = vld [vmem:[#allocation10 + $0x28] sm:$0xf]
        %v585 = vld [vmem:[#allocation10 + $0x2c] sm:$0xf]
        %v586 = vld [vmem:[#allocation10 + $0x30] sm:$0xf]
        %v587 = vld [vmem:[#allocation10 + $0x34] sm:$0xf]
        %v588 = vld [vmem:[#allocation10 + $0x38] sm:$0xf]
        %v589 = vld [vmem:[#allocation10 + $0x3c] sm:$0xf]
        %v590 = vld [vmem:[%s5] sm:$0x1]
        %v592 = vlaneseq
        %v593 = vshrl.u32 %v592, 7
        %v594 = vsub.s32 0, %v593
        %v595 = vrot.slane %v590, %v594
        %v605 = vunpack.c.l.b16 %v566
        %v606 = vunpack.c.l.b16 %v567
        %v607 = vunpack.c.l.b16 %v568
        %v608 = vunpack.c.l.b16 %v569
        %v609 = vunpack.c.l.b16 %v570
        %v610 = vunpack.c.l.b16 %v571
        %v611 = vunpack.c.l.b16 %v572
        %v612 = vunpack.c.l.b16 %v573
        %v613 = vpack.c.b16 %v606, %v605
        %v614 = vpack.c.b16 %v608, %v607
        %v615 = vpack.c.b16 %v610, %v609
        %v616 = vpack.c.b16 %v612, %v611
        %v637 = vunpack.c.l.b16 %v574
        %v638 = vunpack.c.l.b16 %v575
        %v639 = vunpack.c.l.b16 %v576
        %v640 = vunpack.c.l.b16 %v577
        %v641 = vunpack.c.l.b16 %v578
        %v642 = vunpack.c.l.b16 %v579
        %v643 = vunpack.c.l.b16 %v580
        %v644 = vunpack.c.l.b16 %v581
        %v645 = vunpack.c.l.b16 %v582
        %v646 = vunpack.c.l.b16 %v583
        %v647 = vunpack.c.l.b16 %v584
        %v648 = vunpack.c.l.b16 %v585
        %v649 = vunpack.c.l.b16 %v586
        %v650 = vunpack.c.l.b16 %v587
        %v651 = vunpack.c.l.b16 %v588
        %v652 = vunpack.c.l.b16 %v589
        %v653 = vpack.c.b16 %v638, %v637
        %v654 = vpack.c.b16 %v640, %v639
        %v655 = vpack.c.b16 %v642, %v641
        %v656 = vpack.c.b16 %v644, %v643
        %v657 = vpack.c.b16 %v646, %v645
        %v658 = vpack.c.b16 %v648, %v647
        %v659 = vpack.c.b16 %v650, %v649
        %v660 = vpack.c.b16 %v652, %v651
        %669 = vmatprep.subr.bf16.mxu0 0
        %670 = vmatpush1.bf16.msra.mxu0 %v653
        %671 = vmatprep.subr.bf16.mxu0 0
        %672 = vmatpush1.bf16.msra.mxu0 %v654
        %673 = vmatprep.subr.bf16.mxu0 0
        %674 = vmatpush1.bf16.msra.mxu0 %v655
        %675 = vmatprep.subr.bf16.mxu0 0
        %676 = vmatpush1.bf16.msra.mxu0 %v656
        %677 = vmatprep.subr.bf16.mxu0 0
        %678 = vmatpush1.bf16.msra.mxu0 %v657
        %679 = vmatprep.subr.bf16.mxu0 0
        %680 = vmatpush1.bf16.msra.mxu0 %v658
        %681 = vmatprep.subr.bf16.mxu0 0
        %682 = vmatpush1.bf16.msra.mxu0 %v659
        %683 = vmatprep.subr.bf16.mxu0 0
        %684 = vmatpush1.bf16.msra.mxu0 %v660
        %685 = vmatprep.subr.bf16.mxu0 0
        %686 = vmatpush1.bf16.msra.mxu0 0
        %687 = vmatprep.subr.bf16.mxu0 0
        %688 = vmatpush1.bf16.msra.mxu0 0
        %689 = vmatprep.subr.bf16.mxu0 0
        %690 = vmatpush1.bf16.msra.mxu0 0
        %691 = vmatprep.subr.bf16.mxu0 0
        %692 = vmatpush1.bf16.msra.mxu0 0
        %693 = vmatprep.subr.bf16.mxu0 0
        %694 = vmatpush1.bf16.msra.mxu0 0
        %695 = vmatprep.subr.bf16.mxu0 0
        %696 = vmatpush1.bf16.msra.mxu0 0
        %697 = vmatprep.subr.bf16.mxu0 0
        %698 = vmatpush1.bf16.msra.mxu0 0
        %699 = vmatprep.subr.bf16.mxu0 0
        %700 = vmatpush1.bf16.msra.mxu0 0
        %701 = vmatprep.mubr.bf16.mxu0 0
        %702 = vmatmul.mubr.bf16.gmra.mrb[0].mxu0 %v613
        %v703 = vpop.f32.mrb[0].mxu0
        %v704 = vadd.f32 %v595, %v703
        %v705 = vpop.f32.mrb[0].mxu0
        %v706 = vpop.f32.mrb[0].mxu0
        %v707 = vadd.f32 %v595, %v706
        %v708 = vpop.f32.mrb[0].mxu0
        %709 = vmatprep.mubr.bf16.mxu0 0
        %710 = vmatmul.mubr.bf16.gmra.mrb[0].mxu0 %v614
        %v711 = vpop.f32.mrb[0].mxu0
        %v712 = vadd.f32 %v595, %v711
        %v713 = vpop.f32.mrb[0].mxu0
        %v714 = vpop.f32.mrb[0].mxu0
        %v715 = vadd.f32 %v595, %v714
        %v716 = vpop.f32.mrb[0].mxu0
        %717 = vmatprep.mubr.bf16.mxu0 0
        %718 = vmatmul.mubr.bf16.gmra.mrb[0].mxu0 %v615
        %v719 = vpop.f32.mrb[0].mxu0
        %v720 = vadd.f32 %v595, %v719
        %v721 = vpop.f32.mrb[0].mxu0
        %v722 = vpop.f32.mrb[0].mxu0
        %v723 = vadd.f32 %v595, %v722
        %v724 = vpop.f32.mrb[0].mxu0
        %725 = vmatprep.mubr.bf16.mxu0 0
        %726 = vmatmul.mubr.bf16.gmra.mrb[0].mxu0 %v616
        %v727 = vpop.f32.mrb[0].mxu0
        %v728 = vadd.f32 %v595, %v727
        %v729 = vpop.f32.mrb[0].mxu0
        %v730 = vpop.f32.mrb[0].mxu0
        %v731 = vadd.f32 %v595, %v730
        %v732 = vpop.f32.mrb[0].mxu0
        %733 = vdwg.mxu0
        %v734 = vpack.c.bf16 %v707, %v704
        %v735 = vpack.c.bf16 %v715, %v712
        %v736 = vpack.c.bf16 %v723, %v720
        %v737 = vpack.c.bf16 %v731, %v728
        %v738 = vld [vmem:[#allocation2] sm:$0xff]
        %v739 = vld [vmem:[#allocation2 + $0x8] sm:$0xff]
        %740 = vmatprep.subr.bf16.mxu0 0
        %741 = vmatpush1.bf16.xpose.msra.mxu0 %v734
        %742 = vmatprep.subr.bf16.mxu0 0
        %743 = vmatpush1.bf16.xpose.msra.mxu0 %v735
        %744 = vmatprep.subr.bf16.mxu0 0
        %745 = vmatpush1.bf16.xpose.msra.mxu0 %v736
        %746 = vmatprep.subr.bf16.mxu0 0
        %747 = vmatpush1.bf16.xpose.msra.mxu0 %v737
        %748 = vmatprep.subr.bf16.mxu0 0
        %749 = vmatpush1.bf16.xpose.msra.mxu0 0
        %750 = vmatprep.subr.bf16.mxu0 0
        %751 = vmatpush1.bf16.xpose.msra.mxu0 0
        %752 = vmatprep.subr.bf16.mxu0 0
        %753 = vmatpush1.bf16.xpose.msra.mxu0 0
        %754 = vmatprep.subr.bf16.mxu0 0
        %755 = vmatpush1.bf16.xpose.msra.mxu0 0
        %756 = vmatprep.subr.bf16.mxu0 0
        %757 = vmatpush1.bf16.xpose.msra.mxu0 0
        %758 = vmatprep.subr.bf16.mxu0 0
        %759 = vmatpush1.bf16.xpose.msra.mxu0 0
        %760 = vmatprep.subr.bf16.mxu0 0
        %761 = vmatpush1.bf16.xpose.msra.mxu0 0
        %762 = vmatprep.subr.bf16.mxu0 0
        %763 = vmatpush1.bf16.xpose.msra.mxu0 0
        %764 = vmatprep.subr.bf16.mxu0 0
        %765 = vmatpush1.bf16.xpose.msra.mxu0 0
        %766 = vmatprep.subr.bf16.mxu0 0
        %767 = vmatpush1.bf16.xpose.msra.mxu0 0
        %768 = vmatprep.subr.bf16.mxu0 0
        %769 = vmatpush1.bf16.xpose.msra.mxu0 0
        %770 = vmatprep.subr.bf16.mxu0 0
        %771 = vmatpush1.bf16.xpose.msra.mxu0 0
        %772 = vmatprep.mubr.bf16.mxu0 0
        %773 = vmatmul.mubr.bf16.gmra.mrb[0].mxu0 %v738
        %v774 = vpop.f32.mrb[0].mxu0
        %v775 = vadd.f32 0.0, %v774
        %v776 = vpop.f32.mrb[0].mxu0
        %v777 = vpop.f32.mrb[0].mxu0
        %v778 = vadd.f32 0.0, %v777
        %v779 = vpop.f32.mrb[0].mxu0
        %780 = vmatprep.mubr.bf16.mxu0 0
        %781 = vmatmul.mubr.bf16.gmra.mrb[0].mxu0 %v739
        %v782 = vpop.f32.mrb[0].mxu0
        %v783 = vadd.f32 0.0, %v782
        %v784 = vpop.f32.mrb[0].mxu0
        %v785 = vpop.f32.mrb[0].mxu0
        %v786 = vadd.f32 0.0, %v785
        %v787 = vpop.f32.mrb[0].mxu0
        %788 = vdwg.mxu0
        %v789 = vmul.f32 %v775, 0.125
        %v790 = vmul.f32 %v778, 0.125
        %v791 = vmul.f32 %v783, 0.125
        %v792 = vmul.f32 %v786, 0.125
        %vm793 = vcmask 523264
        %v794 = vsel %vm793, %v789, -inf
        %795 = vmax.xlane.f32.xlu0 %v794
        %v796 = vpop.xlane.xlu0 %795
        %v797 = vsel %vm793, %v790, -inf
        %798 = vmax.xlane.f32.xlu0 %v797
        %v799 = vpop.xlane.xlu0 %798
        %v800 = vsel %vm793, %v791, -inf
        %801 = vmax.xlane.f32.xlu0 %v800
        %v802 = vpop.xlane.xlu0 %801
        %v803 = vsel %vm793, %v792, -inf
        %804 = vmax.xlane.f32.xlu0 %v803
        %v805 = vpop.xlane.xlu0 %804
        %v806 = vsub.f32 %v789, %v796
        %v807 = vsub.f32 %v790, %v799
        %v808 = vsub.f32 %v791, %v802
        %v809 = vsub.f32 %v792, %v805
        %v810 = vmul.f32 %v806, 1.442695
        %v811 = vpow.pop %v810
        %v812 = vmul.f32 %v807, 1.442695
        %v813 = vpow.pop %v812
        %v814 = vmul.f32 %v808, 1.442695
        %v815 = vpow.pop %v814
        %v816 = vmul.f32 %v809, 1.442695
        %v817 = vpow.pop %v816
        %v818 = vsel %vm793, %v811, 0.0
        %819 = vadd.xlane.f32.xlu0 %v818
        %v820 = vpop.xlane.xlu0 %819
        %v821 = vsel %vm793, %v813, 0.0
        %822 = vadd.xlane.f32.xlu0 %v821
        %v823 = vpop.xlane.xlu0 %822
        %v824 = vsel %vm793, %v815, 0.0
        %825 = vadd.xlane.f32.xlu0 %v824
        %v826 = vpop.xlane.xlu0 %825
        %v827 = vsel %vm793, %v817, 0.0
        %828 = vadd.xlane.f32.xlu0 %v827
        %v829 = vpop.xlane.xlu0 %828
        %v830 = vrcp.pop %v820
        %v831 = vrcp.pop %v823
        %v832 = vrcp.pop %v826
        %v833 = vrcp.pop %v829
        %v834 = vmul.f32 %v811, %v830
        %v835 = vmul.f32 %v813, %v831
        %v836 = vmul.f32 %v815, %v832
        %v837 = vmul.f32 %v817, %v833
        %v838 = vlaneseq
        %v839 = vand.u32 %v838, 127
        %vm840 = vcmp.eq.s32.totalorder %v839, 64
        %v841 = vsel %vm840, 1, 0
        %v842 = vcvt.s32.f32 %v841
        %v843 = vpack.c.bf16 %v842, %v842
        %844 = vmatprep.subr.bf16.mxu0 0
        %845 = vmatpush1.bf16.xpose.msra.mxu0 %v734
        %846 = vmatprep.subr.bf16.mxu0 0
        %847 = vmatpush1.bf16.xpose.msra.mxu0 %v735
        %848 = vmatprep.subr.bf16.mxu0 0
        %849 = vmatpush1.bf16.xpose.msra.mxu0 %v736
        %850 = vmatprep.subr.bf16.mxu0 0
        %851 = vmatpush1.bf16.xpose.msra.mxu0 %v737
        %852 = vmatprep.subr.bf16.mxu0 0
        %853 = vmatpush1.bf16.xpose.msra.mxu0 0
        %854 = vmatprep.subr.bf16.mxu0 0
        %855 = vmatpush1.bf16.xpose.msra.mxu0 0
        %856 = vmatprep.subr.bf16.mxu0 0
        %857 = vmatpush1.bf16.xpose.msra.mxu0 0
        %858 = vmatprep.subr.bf16.mxu0 0
        %859 = vmatpush1.bf16.xpose.msra.mxu0 0
        %860 = vmatprep.subr.bf16.mxu0 0
        %861 = vmatpush1.bf16.xpose.msra.mxu0 0
        %862 = vmatprep.subr.bf16.mxu0 0
        %863 = vmatpush1.bf16.xpose.msra.mxu0 0
        %864 = vmatprep.subr.bf16.mxu0 0
        %865 = vmatpush1.bf16.xpose.msra.mxu0 0
        %866 = vmatprep.subr.bf16.mxu0 0
        %867 = vmatpush1.bf16.xpose.msra.mxu0 0
        %868 = vmatprep.subr.bf16.mxu0 0
        %869 = vmatpush1.bf16.xpose.msra.mxu0 0
        %870 = vmatprep.subr.bf16.mxu0 0
        %871 = vmatpush1.bf16.xpose.msra.mxu0 0
        %872 = vmatprep.subr.bf16.mxu0 0
        %873 = vmatpush1.bf16.xpose.msra.mxu0 0
        %874 = vmatprep.subr.bf16.mxu0 0
        %875 = vmatpush1.bf16.xpose.msra.mxu0 0
        %876 = vmatprep.mubr.bf16.mxu0 0
        %877 = vmatmul.mubr.bf16.gmra.mrb[0].mxu0 %v843
        %v878 = vpop.f32.mrb[0].mxu0
        %v879 = vadd.f32 0.0, %v878
        %v880 = vpop.f32.mrb[0].mxu0
        %v881 = vpop.f32.mrb[0].mxu0
        %v882 = vpop.f32.mrb[0].mxu0
        %883 = vdwg.mxu0
        %vm884 = vcmask 516096
        %v885 = vsel %vm884, %v879, -inf
        %886 = vmax.xlane.f32.xlu0 %v885
        %v887 = vpop.xlane.xlu0 %886
        %v888 = vsub.f32 %v879, %v887
        %v889 = vmul.f32 %v888, 1.442695
        %v890 = vpow.pop %v889
        %v891 = vsel %vm884, %v890, 0.0
        %892 = vadd.xlane.f32.xlu0 %v891
        %v893 = vpop.xlane.xlu0 %892
        %v894 = vrcp.pop %v893
        %v895 = vmul.f32 %v890, %v894
        %v896 = vmul.f32 %v895, 0.1
        %v897 = vlaneseq
        %v898 = vshrl.u32 %v897, 7
        %v899 = vsub.s32 0, %v898
        %v900 = vrot.slane %v896, %v899
        %v901 = vadd.f32 %v834, %v900
        %v902 = vadd.f32 %v835, %v900
        %v903 = vadd.f32 %v836, %v900
        %v904 = vadd.f32 %v837, %v900
        %v905 = vpack.c.bf16 %v902, %v901
        %v906 = vpack.c.bf16 %v904, %v903
        %v907 = vld [vmem:[#allocation3] sm:$0xff]
        %v908 = vld [vmem:[#allocation3 + $0x8] sm:$0xff]
        %v909 = vld [vmem:[#allocation3 + $0x10] sm:$0xff]
        %v910 = vld [vmem:[#allocation3 + $0x18] sm:$0xff]
        %v912 = vsel %vm793, %v905, 0
        %v915 = vsel %vm793, %v906, 0
        %917 = vmatprep.subr.bf16.mxu0 0
        %918 = vmatpush1.bf16.msra.mxu0 %v613
        %919 = vmatprep.subr.bf16.mxu0 0
        %920 = vmatpush1.bf16.msra.mxu0 %v614
        %921 = vmatprep.subr.bf16.mxu0 0
        %922 = vmatpush1.bf16.msra.mxu0 %v615
        %923 = vmatprep.subr.bf16.mxu0 0
        %924 = vmatpush1.bf16.msra.mxu0 %v616
        %925 = vmatprep.subr.bf16.mxu0 0
        %926 = vmatpush1.bf16.msra.mxu0 0
        %927 = vmatprep.subr.bf16.mxu0 0
        %928 = vmatpush1.bf16.msra.mxu0 0
        %929 = vmatprep.subr.bf16.mxu0 0
        %930 = vmatpush1.bf16.msra.mxu0 0
        %931 = vmatprep.subr.bf16.mxu0 0
        %932 = vmatpush1.bf16.msra.mxu0 0
        %933 = vmatprep.subr.bf16.mxu0 0
        %934 = vmatpush1.bf16.msra.mxu0 0
        %935 = vmatprep.subr.bf16.mxu0 0
        %936 = vmatpush1.bf16.msra.mxu0 0
        %937 = vmatprep.subr.bf16.mxu0 0
        %938 = vmatpush1.bf16.msra.mxu0 0
        %939 = vmatprep.subr.bf16.mxu0 0
        %940 = vmatpush1.bf16.msra.mxu0 0
        %941 = vmatprep.subr.bf16.mxu0 0
        %942 = vmatpush1.bf16.msra.mxu0 0
        %943 = vmatprep.subr.bf16.mxu0 0
        %944 = vmatpush1.bf16.msra.mxu0 0
        %945 = vmatprep.subr.bf16.mxu0 0
        %946 = vmatpush1.bf16.msra.mxu0 0
        %947 = vmatprep.subr.bf16.mxu0 0
        %948 = vmatpush1.bf16.msra.mxu0 0
        %949 = vmatprep.mubr.bf16.mxu0 0
        %950 = vmatmul.mubr.bf16.gmra.mrb[0].mxu0 %v912
        %v951 = vpop.f32.mrb[0].mxu0
        %v952 = vadd.f32 0.0, %v951
        %v953 = vpop.f32.mrb[0].mxu0
        %v954 = vpop.f32.mrb[0].mxu0
        %v955 = vadd.f32 0.0, %v954
        %v956 = vpop.f32.mrb[0].mxu0
        %957 = vmatprep.mubr.bf16.mxu0 0
        %958 = vmatmul.mubr.bf16.gmra.mrb[0].mxu0 %v915
        %v959 = vpop.f32.mrb[0].mxu0
        %v960 = vadd.f32 0.0, %v959
        %v961 = vpop.f32.mrb[0].mxu0
        %v962 = vpop.f32.mrb[0].mxu0
        %v963 = vadd.f32 0.0, %v962
        %v964 = vpop.f32.mrb[0].mxu0
        %965 = vdwg.mxu0
        %v966 = vadd.f32 %v907, %v952
        %v967 = vadd.f32 %v908, %v955
        %v968 = vadd.f32 %v909, %v960
        %v969 = vadd.f32 %v910, %v963
        %970 = vst [vmem:[#allocation3] sm:$0xff] %v966
        %971 = vst [vmem:[#allocation3 + $0x8] sm:$0xff] %v967
        %972 = vst [vmem:[#allocation3 + $0x10] sm:$0xff] %v968
        %973 = vst [vmem:[#allocation3 + $0x18] sm:$0xff] %v969
        %p974 = scmp.eq.s32.totalorder %s34, 1
        // Predicated region
        $region65: #{tpu_custom_call.1} parent=43 // pred_check
          %p975 = pneg %p974
        $region66: #{tpu_custom_call.1} parent=43 // pred_check_branch
          %977 = sbr.rel (%p975) target = $region68
        $region67: #{tpu_custom_call.1} parent=43 // pred_region
          %v978 = vld [vmem:[#allocation3] sm:$0xff]
          %v979 = vld [vmem:[#allocation3 + $0x8] sm:$0xff]
          %v980 = vld [vmem:[#allocation3 + $0x10] sm:$0xff]
          %v981 = vld [vmem:[#allocation3 + $0x18] sm:$0xff]
          %v982 = vmul.f32 %v978, 0.5
          %v983 = vmul.f32 %v979, 0.5
          %v984 = vmul.f32 %v980, 0.5
          %v985 = vmul.f32 %v981, 0.5
          %v986 = vld [vmem:[%s325] sm:$0xff]
          %v987 = vld [vmem:[%s325 + $0x8] sm:$0xff]
          %v988 = vld [vmem:[%s325 + $0x10] sm:$0xff]
          %v989 = vld [vmem:[%s325 + $0x18] sm:$0xff]
          %v990 = vmul.f32 %v986, %v982
          %v991 = vmul.f32 %v987, %v983
          %v992 = vmul.f32 %v988, %v984
          %v993 = vmul.f32 %v989, %v985
          %994 = vst [vmem:[%s378] sm:$0xff] %v990
          %995 = vst [vmem:[%s378 + $0x8] sm:$0xff] %v991
          %996 = vst [vmem:[%s378 + $0x10] sm:$0xff] %v992
          %997 = vst [vmem:[%s378 + $0x18] sm:$0xff] %v993
        $region68: #{tpu_custom_call.1} parent=43 // pred_fallthru
          _
        %s998 = sand.u32 %s201, 1
        %s999 = scalar_lea.sflag [#allocation6], %s998
        %s1000 = sand.u32 %s201, 1
        %s1001 = smul.addr %s1000, 32
        %s1002 = scalar_lea.vmem [#allocation12], %s1001
        // Predicated region
        $region69: #{tpu_custom_call.1} parent=43 // pred_check
          %p1003 = pneg %p211
        $region70: #{tpu_custom_call.1} parent=43 // pred_check_branch
          %1005 = sbr.rel (%p1003) target = $region72
        $region71: #{tpu_custom_call.1} parent=43 // pred_region
          %s1006 = smul.u32 4, %s33
          %s1008 = ssub.s32 512, 512
          %1009 = vsyncadd %s999, %s1008
          %s1010 = smul.addr %s32, 8
          %s1011 = sadd.s32 %s1006, %s1010
          %s1012 = smul.addr %s1011, 128
          %s1013 = scalar_lea.hbm %s6, %s1012
          %s1014 = sshll.u32 %s1002, 4
          %s1015 = int_to_ptr.vmem [resolvable:$true] %s1014
          %1020 = dma.vmem_to_hbm [thread:$0]  %s1015, 512, %s1013, %s999, 128, 128, 8
        $region72: #{tpu_custom_call.1} parent=43 // pred_fallthru
          _
      $region44: #{tpu_custom_call.1} parent=5 // pred_fallthru
        _
      %p1021 = scmp.le.s32.totalorder 2, %s22
      // Predicated region
      $region73: #{tpu_custom_call.1} parent=5 // pred_check
        %p1022 = pneg %p1021
      $region74: #{tpu_custom_call.1} parent=5 // pred_check_branch
        %1024 = sbr.rel (%p1022) target = $region76
      $region75: #{tpu_custom_call.1} parent=5 // pred_region
        %s1025 = ssub.s32 %s22, 2
        // Predicated region
        $region77: #{tpu_custom_call.1} parent=75 // pred_check
          %p1026 = pneg %p217
        $region78: #{tpu_custom_call.1} parent=75 // pred_check_branch
          %1028 = sbr.rel (%p1026) target = $region80
        $region79: #{tpu_custom_call.1} parent=75 // pred_region
          %s1029 = sand.u32 %s202, 1
          %s1030 = scalar_lea.sflag [#allocation6], %s1029
          %s1031 = sand.u32 %s202, 1
          %s1032 = smul.addr %s1031, 32
          %s1033 = scalar_lea.vmem [#allocation12], %s1032
          %1034 = dma.done %s1030, 512
        $region80: #{tpu_custom_call.1} parent=75 // pred_fallthru
          _
      $region76: #{tpu_custom_call.1} parent=5 // pred_fallthru
        _
    $region6: #{tpu_custom_call.1} parent=1 // loop_footer
      %s26 = sadd.s32 1, %s22
    $region7: #{tpu_custom_call.1} parent=1 // loop_footer_branch
      %21 = sbr.rel target = $region3
    $region8: #{tpu_custom_call.1} parent=1 // loop_exit
      _
    %1035 = vsyncpa [#allocation5], 1
    %s1036 = scalar_lea.sflag [#allocation5], 1
    %1037 = vsyncpa %s1036, 1
    %1038 = vsyncpa [#allocation8], 1
    %s1039 = scalar_lea.sflag [#allocation8], 1
    %1040 = vsyncpa %s1039, 1
    %1041 = vsyncpa [#allocation11], 1
    %1042 = vsyncpa [#allocation6], 1
    %s1043 = scalar_lea.sflag [#allocation6], 1
    %1044 = vsyncpa %s1043, 1

</llo_original>
